<compile_context>
chip_gen: v5e
topology: v5e:2x2
jax: 0.10.0
libtpu: 0.0.40
codegen_flags: <defaults>
</compile_context>

<pallas_src>
import numpy as np
import jax
import jax.numpy as jnp
from jax.experimental import pallas as pl
from jax.experimental.pallas import tpu as pltpu


NEG_SLOPE = 0.2  # LeakyReLU slope used by the Cell_BLAST discriminator MLP


def adversarial_kernel(x_ref,             # (TILE_N, D)  bf16  VMEM (pipelined)
                       w1_ref, b1_ref,    # (D, H) bf16, (1, H) f32   VMEM (resident)
                       w2_ref, b2_ref,    # (H, B) bf16, (1, B) f32   VMEM (resident)
                       out_ref):          # (TILE_N, B)  f32   VMEM (pipelined, tile-blocked)
    # depth-1 discriminator: LeakyReLU(x @ W1 + b1) @ W2 + b2, whole tile on the MXU.
    # bf16 inputs / f32 accumulation; dropout = 0.0 in the default config -> no-op.
    h = jnp.dot(x_ref[...], w1_ref[...],
                preferred_element_type=jnp.float32) + b1_ref[...]
    h = jnp.maximum(h, NEG_SLOPE * h)                       # LeakyReLU(0.2), f32 VPU
    logits = jnp.dot(h.astype(jnp.bfloat16), w2_ref[...],
                     preferred_element_type=jnp.float32) + b2_ref[...]
    out_ref[...] = logits


def adversarial_forward(x, mask, w1, b1, w2, b2, *, tile_n=512):
    """Adversarial.forward: pred(mlp(x[mask])).

    Returns (logits, count): logits has shape (N, batch_dim); rows [0, count) equal the
    torch result pred(mlp(x[mask])) in original row order, rows [count, N) are zero.
    """
    n, d = x.shape
    h_dim = w1.shape[1]
    b_dim = w2.shape[1]
    num_tiles = -(-n // tile_n)
    n_pad = num_tiles * tile_n

    # pad rows up to a tile multiple; padded rows are discarded by the wrapper scatter.
    x_p = jnp.zeros((n_pad, d), jnp.bfloat16).at[:n, :].set(x.astype(jnp.bfloat16))

    out_full = pl.pallas_call(
        adversarial_kernel,
        out_shape=jax.ShapeDtypeStruct((n_pad, b_dim), jnp.float32),
        grid=(num_tiles,),
        in_specs=[
            pl.BlockSpec((tile_n, d), lambda t: (t, 0)),       # x tile (pipelined)
            pl.BlockSpec((d, h_dim), lambda t: (0, 0)),        # W1 (resident)
            pl.BlockSpec((1, h_dim), lambda t: (0, 0)),        # b1 (resident)
            pl.BlockSpec((h_dim, b_dim), lambda t: (0, 0)),    # W2 (resident)
            pl.BlockSpec((1, b_dim), lambda t: (0, 0)),        # b2 (resident)
        ],
        out_specs=pl.BlockSpec((tile_n, b_dim), lambda t: (t, 0)),
        compiler_params=pltpu.CompilerParams(
            # every tile writes its own disjoint output block -> fully parallel
            # (megacore-sharded on v7x, harmless on v5e/v6e).
            dimension_semantics=("parallel",),
        ),
    )(x_p,
      w1.astype(jnp.bfloat16), b1.reshape(1, h_dim).astype(jnp.float32),
      w2.astype(jnp.bfloat16), b2.reshape(1, b_dim).astype(jnp.float32))

    # ---- x[mask] compaction (dynamic shape) done wrapper-side -----------------------
    # One cheap cumsum + scatter in XLA; dropped rows get destination n (out of bounds)
    # and are discarded, so rows [count, n) of the result stay exactly zero.
    mask_i32 = mask.astype(jnp.int32)
    count = jnp.sum(mask_i32)
    dest = jnp.where(mask, jnp.cumsum(mask_i32) - 1, n)
    out = jnp.zeros((n, b_dim), jnp.float32).at[dest].set(out_full[:n], mode="drop")
    return out, count


if __name__ == "__main__":
    # Adversarial(batch_dim=4, latent_dim=32, h_dim=128, depth=1); N = 200 cells
    N, batch_dim, latent_dim, h_dim = 200, 4, 32, 128

    key = jax.random.PRNGKey(0)
    kx, kb, kd, kw1, kb1, kw2, kb2 = jax.random.split(key, 7)

    x = jax.random.normal(kx, (N, latent_dim), dtype=jnp.float32)

    # one-hot batch indicator with ~30% of rows zeroed -> non-trivial mask
    labels = jax.random.randint(kb, (N,), 0, batch_dim)
    b = jax.nn.one_hot(labels, batch_dim, dtype=jnp.float32)
    drop = (jax.random.uniform(kd, (N,)) < 0.3).astype(jnp.float32)
    b = b * (1.0 - drop)[:, None]

    # discriminator parameters (depth-1 MLP + pred Linear)
    w1 = jax.random.normal(kw1, (latent_dim, h_dim), jnp.float32) * 0.1
    b1 = jax.random.normal(kb1, (h_dim,), jnp.float32) * 0.1
    w2 = jax.random.normal(kw2, (h_dim, batch_dim), jnp.float32) * 0.1
    b2 = jax.random.normal(kb2, (batch_dim,), jnp.float32) * 0.1

    # get_mask (the torch forward() receives the mask as an argument)
    mask = jnp.sum(b, axis=1) > 0

    out, cnt = adversarial_forward(x, mask, w1, b1, w2, b2)
    out = jax.block_until_ready(out)
    cnt = jax.block_until_ready(cnt)

    # Reference (numpy f32, matching torch semantics: pred(mlp(x[b.sum(1) > 0])))
    x_np, b_np = np.asarray(x), np.asarray(b)
    w1_np, b1_np, w2_np, b2_np = map(np.asarray, (w1, b1, w2, b2))
    ref_mask = b_np.sum(axis=1) > 0
    xm = x_np[ref_mask]
    hh = xm @ w1_np + b1_np
    hh = np.where(hh > 0, hh, NEG_SLOPE * hh)
    ref = hh @ w2_np + b2_np

    m = int(np.asarray(cnt))
    assert m == int(ref_mask.sum()), (m, int(ref_mask.sum()))
    # tolerance accommodates bf16 MXU inputs with f32 accumulation vs. the f32 reference
    np.testing.assert_allclose(np.asarray(out)[:m], ref, rtol=2e-2, atol=2e-2)
    np.testing.assert_allclose(np.asarray(out)[m:], 0.0, atol=1e-6)
    print("KERNEL_OK")
</pallas_src>

<mosaic_0001>
module attributes {stable_mosaic.version = 11 : i64} {
  func.func @adversarial_kernel(%arg0: i32, %arg1: memref<512x32xbf16, #tpu.memory_space<vmem>>, %arg2: memref<32x128xbf16, #tpu.memory_space<vmem>>, %arg3: memref<1x128xf32, #tpu.memory_space<vmem>>, %arg4: memref<128x4xbf16, #tpu.memory_space<vmem>>, %arg5: memref<1x4xf32, #tpu.memory_space<vmem>>, %arg6: memref<512x4xf32, #tpu.memory_space<vmem>>) attributes {dimension_semantics = [#tpu.dimension_semantics<parallel>], iteration_bounds = array<i64: 1>, scalar_prefetch = 0 : i64, scratch_operands = 0 : i64, tpu.core_type = #tpu.core_type<tc>, window_params = [{transform_indices = @transform_0, window_bounds = array<i64: 512, 32>}, {pipeline_mode = #tpu.pipeline_mode<synchronous>, transform_indices = @transform_1, window_bounds = array<i64: 32, 128>}, {pipeline_mode = #tpu.pipeline_mode<synchronous>, transform_indices = @transform_2, window_bounds = array<i64: 1, 128>}, {pipeline_mode = #tpu.pipeline_mode<synchronous>, transform_indices = @transform_3, window_bounds = array<i64: 128, 4>}, {pipeline_mode = #tpu.pipeline_mode<synchronous>, transform_indices = @transform_4, window_bounds = array<i64: 1, 4>}, {transform_indices = @transform_5, window_bounds = array<i64: 512, 4>}]} {
    %c0 = arith.constant 0 : index
    %c0_0 = arith.constant 0 : index
    %0 = vector.load %arg1[%c0, %c0_0] : memref<512x32xbf16, #tpu.memory_space<vmem>>, vector<512x32xbf16>
    %c0_1 = arith.constant 0 : index
    %c0_2 = arith.constant 0 : index
    %1 = vector.load %arg2[%c0_1, %c0_2] : memref<32x128xbf16, #tpu.memory_space<vmem>>, vector<32x128xbf16>
    %cst = arith.constant dense<0.000000e+00> : vector<512x128xf32>
    %2 = tpu.matmul %0, %1, %cst {dimension_numbers = #tpu.dot_dimension_numbers<[1], [0], [0], [1], [0, 0, 1, 1], [], []>} : vector<512x32xbf16>, vector<32x128xbf16>, vector<512x128xf32> -> vector<512x128xf32>
    %c0_3 = arith.constant 0 : index
    %c0_4 = arith.constant 0 : index
    %3 = vector.load %arg3[%c0_3, %c0_4] : memref<1x128xf32, #tpu.memory_space<vmem>>, vector<1x128xf32>
    %4 = vector.broadcast %3 : vector<1x128xf32> to vector<512x128xf32>
    %5 = arith.addf %2, %4 : vector<512x128xf32>
    %cst_5 = arith.constant 2.000000e-01 : f32
    %6 = vector.broadcast %cst_5 : f32 to vector<512x128xf32>
    %7 = arith.mulf %6, %5 : vector<512x128xf32>
    %8 = arith.maximumf %5, %7 : vector<512x128xf32>
    %9 = arith.truncf %8 : vector<512x128xf32> to vector<512x128xbf16>
    %c0_6 = arith.constant 0 : index
    %c0_7 = arith.constant 0 : index
    %10 = vector.load %arg4[%c0_6, %c0_7] : memref<128x4xbf16, #tpu.memory_space<vmem>>, vector<128x4xbf16>
    %cst_8 = arith.constant dense<0.000000e+00> : vector<512x4xf32>
    %11 = tpu.matmul %9, %10, %cst_8 {dimension_numbers = #tpu.dot_dimension_numbers<[1], [0], [0], [1], [0, 0, 1, 1], [], []>} : vector<512x128xbf16>, vector<128x4xbf16>, vector<512x4xf32> -> vector<512x4xf32>
    %c0_9 = arith.constant 0 : index
    %c0_10 = arith.constant 0 : index
    %12 = vector.load %arg5[%c0_9, %c0_10] : memref<1x4xf32, #tpu.memory_space<vmem>>, vector<1x4xf32>
    %13 = vector.broadcast %12 : vector<1x4xf32> to vector<512x4xf32>
    %14 = arith.addf %11, %13 : vector<512x4xf32>
    %c0_11 = arith.constant 0 : index
    %c0_12 = arith.constant 0 : index
    %15 = vector.load %arg6[%c0_11, %c0_12] : memref<512x4xf32, #tpu.memory_space<vmem>>, vector<512x4xf32>
    tpu.vector_store %arg6[%c0_11, %c0_12], %14 {strides = array<i32>} : memref<512x4xf32, #tpu.memory_space<vmem>>, vector<512x4xf32>,
    return
  }
  func.func @transform_0(%arg0: i32) -> (i32, i32) {
    %c0_i32 = arith.constant 0 : i32
    %c0_i32_0 = arith.constant 0 : i32
    return %arg0, %c0_i32 : i32, i32
  }
  func.func @transform_1(%arg0: i32) -> (i32, i32) {
    %c0_i32 = arith.constant 0 : i32
    %c0_i32_0 = arith.constant 0 : i32
    %c0_i32_1 = arith.constant 0 : i32
    return %c0_i32, %c0_i32_0 : i32, i32
  }
  func.func @transform_2(%arg0: i32) -> (i32, i32) {
    %c0_i32 = arith.constant 0 : i32
    %c0_i32_0 = arith.constant 0 : i32
    %c0_i32_1 = arith.constant 0 : i32
    return %c0_i32, %c0_i32_0 : i32, i32
  }
  func.func @transform_3(%arg0: i32) -> (i32, i32) {
    %c0_i32 = arith.constant 0 : i32
    %c0_i32_0 = arith.constant 0 : i32
    %c0_i32_1 = arith.constant 0 : i32
    return %c0_i32, %c0_i32_0 : i32, i32
  }
  func.func @transform_4(%arg0: i32) -> (i32, i32) {
    %c0_i32 = arith.constant 0 : i32
    %c0_i32_0 = arith.constant 0 : i32
    %c0_i32_1 = arith.constant 0 : i32
    return %c0_i32, %c0_i32_0 : i32, i32
  }
  func.func @transform_5(%arg0: i32) -> (i32, i32) {
    %c0_i32 = arith.constant 0 : i32
    %c0_i32_0 = arith.constant 0 : i32
    return %arg0, %c0_i32 : i32, i32
  }
}

</mosaic_0001>

<llo_original>
// kernel: tpu_custom_call.1
$region0: #{tpu_custom_call.1}
  #allocation0 [shape = 'u32[]', space=smem, size = 0x4, offset = 0x4, fixed_abs, tag = 'smem constant byte address 0x4 - core index']
  #allocation1 [shape = 'u32[72,128]{1,0:T(1,128)}', space=vmem, size = 0x9000, scoped, tag = 'internal scratch']
  %s0 = inlined_call_operand.vmem [shape: bf16[512,32], index: 0, kind: input, shape index: {}]
  %s1 = inlined_call_operand.vmem [shape: bf16[32,128], index: 1, kind: input, shape index: {}]
  %s2 = inlined_call_operand.vmem [shape: f32[1,128], index: 2, kind: input, shape index: {}]
  %s3 = inlined_call_operand.vmem [shape: bf16[128,4], index: 3, kind: input, shape index: {}]
  %s4 = inlined_call_operand.vmem [shape: f32[1,4], index: 4, kind: input, shape index: {}]
  %s5 = inlined_call_operand.vmem [shape: f32[512,4], index: 5, kind: output, shape index: {}]
  %s6 = sld [smem:[#allocation0]]
  $region30: #{tpu_custom_call.1} parent=0
    _
  %s8 = ssub.s32 1, %s6
  %s9 = scalar_select 0, %s8, %s6
  // Predicated region
  $region2: #{tpu_custom_call.1} parent=0 // pred_check
    _
  $region3: #{tpu_custom_call.1} parent=0 // pred_check_branch
    %11 = sbr.rel (0) target = $region5
  $region4: #{tpu_custom_call.1} parent=0 // pred_region
    _
  $region5: #{tpu_custom_call.1} parent=0 // pred_fallthru
    _
  // Predicated region
  $region6: #{tpu_custom_call.1} parent=0 // pred_check
    _
  $region7: #{tpu_custom_call.1} parent=0 // pred_check_branch
    %13 = sbr.rel (0) target = $region9
  $region8: #{tpu_custom_call.1} parent=0 // pred_region
    _
  $region9: #{tpu_custom_call.1} parent=0 // pred_fallthru
    _
  // Predicated region
  $region10: #{tpu_custom_call.1} parent=0 // pred_check
    _
  $region11: #{tpu_custom_call.1} parent=0 // pred_check_branch
    %15 = sbr.rel (0) target = $region13
  $region12: #{tpu_custom_call.1} parent=0 // pred_region
    _
  $region13: #{tpu_custom_call.1} parent=0 // pred_fallthru
    _
  // Predicated region
  $region14: #{tpu_custom_call.1} parent=0 // pred_check
    _
  $region15: #{tpu_custom_call.1} parent=0 // pred_check_branch
    %17 = sbr.rel (0) target = $region17
  $region16: #{tpu_custom_call.1} parent=0 // pred_region
    _
  $region17: #{tpu_custom_call.1} parent=0 // pred_fallthru
    _
  // Predicated region
  $region18: #{tpu_custom_call.1} parent=0 // pred_check
    _
  $region19: #{tpu_custom_call.1} parent=0 // pred_check_branch
    %19 = sbr.rel (0) target = $region21
  $region20: #{tpu_custom_call.1} parent=0 // pred_region
    _
  $region21: #{tpu_custom_call.1} parent=0 // pred_fallthru
    _
  %v21 = vld [vmem:[%s0] sm:$0xf]
  %v22 = vld [vmem:[%s0 + $0x4] sm:$0xf]
  %v23 = vld [vmem:[%s0 + $0x8] sm:$0xf]
  %v24 = vld [vmem:[%s0 + $0xc] sm:$0xf]
  %v25 = vld [vmem:[%s0 + $0x10] sm:$0xf]
  %v26 = vld [vmem:[%s0 + $0x14] sm:$0xf]
  %v27 = vld [vmem:[%s0 + $0x18] sm:$0xf]
  %v28 = vld [vmem:[%s0 + $0x1c] sm:$0xf]
  %v29 = vld [vmem:[%s0 + $0x20] sm:$0xf]
  %v30 = vld [vmem:[%s0 + $0x24] sm:$0xf]
  %v31 = vld [vmem:[%s0 + $0x28] sm:$0xf]
  %v32 = vld [vmem:[%s0 + $0x2c] sm:$0xf]
  %v33 = vld [vmem:[%s0 + $0x30] sm:$0xf]
  %v34 = vld [vmem:[%s0 + $0x34] sm:$0xf]
  %v35 = vld [vmem:[%s0 + $0x38] sm:$0xf]
  %v36 = vld [vmem:[%s0 + $0x3c] sm:$0xf]
  %v37 = vld [vmem:[%s0 + $0x40] sm:$0xf]
  %v38 = vld [vmem:[%s0 + $0x44] sm:$0xf]
  %v39 = vld [vmem:[%s0 + $0x48] sm:$0xf]
  %v40 = vld [vmem:[%s0 + $0x4c] sm:$0xf]
  %v41 = vld [vmem:[%s0 + $0x50] sm:$0xf]
  %v42 = vld [vmem:[%s0 + $0x54] sm:$0xf]
  %v43 = vld [vmem:[%s0 + $0x58] sm:$0xf]
  %v44 = vld [vmem:[%s0 + $0x5c] sm:$0xf]
  %v45 = vld [vmem:[%s0 + $0x60] sm:$0xf]
  %v46 = vld [vmem:[%s0 + $0x64] sm:$0xf]
  %v47 = vld [vmem:[%s0 + $0x68] sm:$0xf]
  %v48 = vld [vmem:[%s0 + $0x6c] sm:$0xf]
  %v49 = vld [vmem:[%s0 + $0x70] sm:$0xf]
  %v50 = vld [vmem:[%s0 + $0x74] sm:$0xf]
  %v51 = vld [vmem:[%s0 + $0x78] sm:$0xf]
  %v52 = vld [vmem:[%s0 + $0x7c] sm:$0xf]
  %v53 = vld [vmem:[%s0 + $0x80] sm:$0xf]
  %v54 = vld [vmem:[%s0 + $0x84] sm:$0xf]
  %v55 = vld [vmem:[%s0 + $0x88] sm:$0xf]
  %v56 = vld [vmem:[%s0 + $0x8c] sm:$0xf]
  %v57 = vld [vmem:[%s0 + $0x90] sm:$0xf]
  %v58 = vld [vmem:[%s0 + $0x94] sm:$0xf]
  %v59 = vld [vmem:[%s0 + $0x98] sm:$0xf]
  %v60 = vld [vmem:[%s0 + $0x9c] sm:$0xf]
  %v61 = vld [vmem:[%s0 + $0xa0] sm:$0xf]
  %v62 = vld [vmem:[%s0 + $0xa4] sm:$0xf]
  %v63 = vld [vmem:[%s0 + $0xa8] sm:$0xf]
  %v64 = vld [vmem:[%s0 + $0xac] sm:$0xf]
  %v65 = vld [vmem:[%s0 + $0xb0] sm:$0xf]
  %v66 = vld [vmem:[%s0 + $0xb4] sm:$0xf]
  %v67 = vld [vmem:[%s0 + $0xb8] sm:$0xf]
  %v68 = vld [vmem:[%s0 + $0xbc] sm:$0xf]
  %v69 = vld [vmem:[%s0 + $0xc0] sm:$0xf]
  %v70 = vld [vmem:[%s0 + $0xc4] sm:$0xf]
  %v71 = vld [vmem:[%s0 + $0xc8] sm:$0xf]
  %v72 = vld [vmem:[%s0 + $0xcc] sm:$0xf]
  %v73 = vld [vmem:[%s0 + $0xd0] sm:$0xf]
  %v74 = vld [vmem:[%s0 + $0xd4] sm:$0xf]
  %v75 = vld [vmem:[%s0 + $0xd8] sm:$0xf]
  %v76 = vld [vmem:[%s0 + $0xdc] sm:$0xf]
  %v77 = vld [vmem:[%s0 + $0xe0] sm:$0xf]
  %v78 = vld [vmem:[%s0 + $0xe4] sm:$0xf]
  %v79 = vld [vmem:[%s0 + $0xe8] sm:$0xf]
  %v80 = vld [vmem:[%s0 + $0xec] sm:$0xf]
  %v81 = vld [vmem:[%s0 + $0xf0] sm:$0xf]
  %v82 = vld [vmem:[%s0 + $0xf4] sm:$0xf]
  %v83 = vld [vmem:[%s0 + $0xf8] sm:$0xf]
  %v84 = vld [vmem:[%s0 + $0xfc] sm:$0xf]
  %v85 = vld [vmem:[%s1] sm:$0xf]
  %v86 = vld [vmem:[%s1 + $0x4] sm:$0xf]
  %v87 = vld [vmem:[%s1 + $0x8] sm:$0xf]
  %v88 = vld [vmem:[%s1 + $0xc] sm:$0xf]
  %v89 = vld [vmem:[%s2] sm:$0x1]
  %v91 = vperm.slane %v89, 0
  %v157 = vunpack.c.l.b16 %v21
  %v158 = vunpack.c.l.b16 %v22
  %v159 = vunpack.c.l.b16 %v23
  %v160 = vunpack.c.l.b16 %v24
  %v161 = vunpack.c.l.b16 %v25
  %v162 = vunpack.c.l.b16 %v26
  %v163 = vunpack.c.l.b16 %v27
  %v164 = vunpack.c.l.b16 %v28
  %v165 = vunpack.c.l.b16 %v29
  %v166 = vunpack.c.l.b16 %v30
  %v167 = vunpack.c.l.b16 %v31
  %v168 = vunpack.c.l.b16 %v32
  %v169 = vunpack.c.l.b16 %v33
  %v170 = vunpack.c.l.b16 %v34
  %v171 = vunpack.c.l.b16 %v35
  %v172 = vunpack.c.l.b16 %v36
  %v173 = vunpack.c.l.b16 %v37
  %v174 = vunpack.c.l.b16 %v38
  %v175 = vunpack.c.l.b16 %v39
  %v176 = vunpack.c.l.b16 %v40
  %v177 = vunpack.c.l.b16 %v41
  %v178 = vunpack.c.l.b16 %v42
  %v179 = vunpack.c.l.b16 %v43
  %v180 = vunpack.c.l.b16 %v44
  %v181 = vunpack.c.l.b16 %v45
  %v182 = vunpack.c.l.b16 %v46
  %v183 = vunpack.c.l.b16 %v47
  %v184 = vunpack.c.l.b16 %v48
  %v185 = vunpack.c.l.b16 %v49
  %v186 = vunpack.c.l.b16 %v50
  %v187 = vunpack.c.l.b16 %v51
  %v188 = vunpack.c.l.b16 %v52
  %v189 = vunpack.c.l.b16 %v53
  %v190 = vunpack.c.l.b16 %v54
  %v191 = vunpack.c.l.b16 %v55
  %v192 = vunpack.c.l.b16 %v56
  %v193 = vunpack.c.l.b16 %v57
  %v194 = vunpack.c.l.b16 %v58
  %v195 = vunpack.c.l.b16 %v59
  %v196 = vunpack.c.l.b16 %v60
  %v197 = vunpack.c.l.b16 %v61
  %v198 = vunpack.c.l.b16 %v62
  %v199 = vunpack.c.l.b16 %v63
  %v200 = vunpack.c.l.b16 %v64
  %v201 = vunpack.c.l.b16 %v65
  %v202 = vunpack.c.l.b16 %v66
  %v203 = vunpack.c.l.b16 %v67
  %v204 = vunpack.c.l.b16 %v68
  %v205 = vunpack.c.l.b16 %v69
  %v206 = vunpack.c.l.b16 %v70
  %v207 = vunpack.c.l.b16 %v71
  %v208 = vunpack.c.l.b16 %v72
  %v209 = vunpack.c.l.b16 %v73
  %v210 = vunpack.c.l.b16 %v74
  %v211 = vunpack.c.l.b16 %v75
  %v212 = vunpack.c.l.b16 %v76
  %v213 = vunpack.c.l.b16 %v77
  %v214 = vunpack.c.l.b16 %v78
  %v215 = vunpack.c.l.b16 %v79
  %v216 = vunpack.c.l.b16 %v80
  %v217 = vunpack.c.l.b16 %v81
  %v218 = vunpack.c.l.b16 %v82
  %v219 = vunpack.c.l.b16 %v83
  %v220 = vunpack.c.l.b16 %v84
  %v221 = vpack.c.b16 %v158, %v157
  %v222 = vpack.c.b16 %v160, %v159
  %v223 = vpack.c.b16 %v162, %v161
  %v224 = vpack.c.b16 %v164, %v163
  %v225 = vpack.c.b16 %v166, %v165
  %v226 = vpack.c.b16 %v168, %v167
  %v227 = vpack.c.b16 %v170, %v169
  %v228 = vpack.c.b16 %v172, %v171
  %v229 = vpack.c.b16 %v174, %v173
  %v230 = vpack.c.b16 %v176, %v175
  %v231 = vpack.c.b16 %v178, %v177
  %v232 = vpack.c.b16 %v180, %v179
  %v233 = vpack.c.b16 %v182, %v181
  %v234 = vpack.c.b16 %v184, %v183
  %v235 = vpack.c.b16 %v186, %v185
  %v236 = vpack.c.b16 %v188, %v187
  %v237 = vpack.c.b16 %v190, %v189
  %v238 = vpack.c.b16 %v192, %v191
  %v239 = vpack.c.b16 %v194, %v193
  %v240 = vpack.c.b16 %v196, %v195
  %v241 = vpack.c.b16 %v198, %v197
  %v242 = vpack.c.b16 %v200, %v199
  %v243 = vpack.c.b16 %v202, %v201
  %v244 = vpack.c.b16 %v204, %v203
  %v245 = vpack.c.b16 %v206, %v205
  %v246 = vpack.c.b16 %v208, %v207
  %v247 = vpack.c.b16 %v210, %v209
  %v248 = vpack.c.b16 %v212, %v211
  %v249 = vpack.c.b16 %v214, %v213
  %v250 = vpack.c.b16 %v216, %v215
  %v251 = vpack.c.b16 %v218, %v217
  %v252 = vpack.c.b16 %v220, %v219
  %v257 = vunpack.c.l.b16 %v85
  %v258 = vunpack.c.l.b16 %v86
  %v259 = vunpack.c.l.b16 %v87
  %v260 = vunpack.c.l.b16 %v88
  %v261 = vpack.c.b16 %v258, %v257
  %v262 = vpack.c.b16 %v260, %v259
  %vm265 = vcmask 261120
  %v267 = vsel %vm265, %v221, 0
  %v270 = vsel %vm265, %v222, 0
  %v273 = vsel %vm265, %v223, 0
  %v276 = vsel %vm265, %v224, 0
  %v279 = vsel %vm265, %v225, 0
  %v282 = vsel %vm265, %v226, 0
  %v285 = vsel %vm265, %v227, 0
  %v288 = vsel %vm265, %v228, 0
  %v291 = vsel %vm265, %v229, 0
  %v294 = vsel %vm265, %v230, 0
  %v297 = vsel %vm265, %v231, 0
  %v300 = vsel %vm265, %v232, 0
  %v303 = vsel %vm265, %v233, 0
  %v306 = vsel %vm265, %v234, 0
  %v309 = vsel %vm265, %v235, 0
  %v312 = vsel %vm265, %v236, 0
  %v315 = vsel %vm265, %v237, 0
  %v318 = vsel %vm265, %v238, 0
  %v321 = vsel %vm265, %v239, 0
  %v324 = vsel %vm265, %v240, 0
  %v327 = vsel %vm265, %v241, 0
  %v330 = vsel %vm265, %v242, 0
  %v333 = vsel %vm265, %v243, 0
  %v336 = vsel %vm265, %v244, 0
  %v339 = vsel %vm265, %v245, 0
  %v342 = vsel %vm265, %v246, 0
  %v345 = vsel %vm265, %v247, 0
  %v348 = vsel %vm265, %v248, 0
  %v351 = vsel %vm265, %v249, 0
  %v354 = vsel %vm265, %v250, 0
  %v357 = vsel %vm265, %v251, 0
  %v360 = vsel %vm265, %v252, 0
  %362 = vmatpush.bf16.msra.mxu0 0
  %363 = vmatpush.bf16.msra.mxu0 0
  %364 = vmatpush.bf16.msra.mxu0 0
  %365 = vmatpush.bf16.msra.mxu0 0
  %366 = vmatpush.bf16.msra.mxu0 0
  %367 = vmatpush.bf16.msra.mxu0 0
  %368 = vmatpush.bf16.msra.mxu0 %v262
  %369 = vmatpush.bf16.msra.mxu0 %v261
  %370 = vmatmul.bf16.gmra.mxu0 %v267
  %v371 = vpop.f32.mrf.mxu0
  %v372 = vadd.f32 %v91, %v371
  %v373 = vpop.f32.mrf.mxu0
  %v374 = vadd.f32 %v91, %v373
  %375 = vmatmul.bf16.gmra.mxu0 %v270
  %v376 = vpop.f32.mrf.mxu0
  %v377 = vadd.f32 %v91, %v376
  %v378 = vpop.f32.mrf.mxu0
  %v379 = vadd.f32 %v91, %v378
  %380 = vmatmul.bf16.gmra.mxu0 %v273
  %v381 = vpop.f32.mrf.mxu0
  %v382 = vadd.f32 %v91, %v381
  %v383 = vpop.f32.mrf.mxu0
  %v384 = vadd.f32 %v91, %v383
  %385 = vmatmul.bf16.gmra.mxu0 %v276
  %v386 = vpop.f32.mrf.mxu0
  %v387 = vadd.f32 %v91, %v386
  %v388 = vpop.f32.mrf.mxu0
  %v389 = vadd.f32 %v91, %v388
  %390 = vmatmul.bf16.gmra.mxu0 %v279
  %v391 = vpop.f32.mrf.mxu0
  %v392 = vadd.f32 %v91, %v391
  %v393 = vpop.f32.mrf.mxu0
  %v394 = vadd.f32 %v91, %v393
  %395 = vmatmul.bf16.gmra.mxu0 %v282
  %v396 = vpop.f32.mrf.mxu0
  %v397 = vadd.f32 %v91, %v396
  %v398 = vpop.f32.mrf.mxu0
  %v399 = vadd.f32 %v91, %v398
  %400 = vmatmul.bf16.gmra.mxu0 %v285
  %v401 = vpop.f32.mrf.mxu0
  %v402 = vadd.f32 %v91, %v401
  %v403 = vpop.f32.mrf.mxu0
  %v404 = vadd.f32 %v91, %v403
  %405 = vmatmul.bf16.gmra.mxu0 %v288
  %v406 = vpop.f32.mrf.mxu0
  %v407 = vadd.f32 %v91, %v406
  %v408 = vpop.f32.mrf.mxu0
  %v409 = vadd.f32 %v91, %v408
  %410 = vmatmul.bf16.gmra.mxu0 %v291
  %v411 = vpop.f32.mrf.mxu0
  %v412 = vadd.f32 %v91, %v411
  %v413 = vpop.f32.mrf.mxu0
  %v414 = vadd.f32 %v91, %v413
  %415 = vmatmul.bf16.gmra.mxu0 %v294
  %v416 = vpop.f32.mrf.mxu0
  %v417 = vadd.f32 %v91, %v416
  %v418 = vpop.f32.mrf.mxu0
  %v419 = vadd.f32 %v91, %v418
  %420 = vmatmul.bf16.gmra.mxu0 %v297
  %v421 = vpop.f32.mrf.mxu0
  %v422 = vadd.f32 %v91, %v421
  %v423 = vpop.f32.mrf.mxu0
  %v424 = vadd.f32 %v91, %v423
  %425 = vmatmul.bf16.gmra.mxu0 %v300
  %v426 = vpop.f32.mrf.mxu0
  %v427 = vadd.f32 %v91, %v426
  %v428 = vpop.f32.mrf.mxu0
  %v429 = vadd.f32 %v91, %v428
  %430 = vmatmul.bf16.gmra.mxu0 %v303
  %v431 = vpop.f32.mrf.mxu0
  %v432 = vadd.f32 %v91, %v431
  %v433 = vpop.f32.mrf.mxu0
  %v434 = vadd.f32 %v91, %v433
  %435 = vmatmul.bf16.gmra.mxu0 %v306
  %v436 = vpop.f32.mrf.mxu0
  %v437 = vadd.f32 %v91, %v436
  %v438 = vpop.f32.mrf.mxu0
  %v439 = vadd.f32 %v91, %v438
  %440 = vmatmul.bf16.gmra.mxu0 %v309
  %v441 = vpop.f32.mrf.mxu0
  %v442 = vadd.f32 %v91, %v441
  %v443 = vpop.f32.mrf.mxu0
  %v444 = vadd.f32 %v91, %v443
  %445 = vmatmul.bf16.gmra.mxu0 %v312
  %v446 = vpop.f32.mrf.mxu0
  %v447 = vadd.f32 %v91, %v446
  %v448 = vpop.f32.mrf.mxu0
  %v449 = vadd.f32 %v91, %v448
  %450 = vmatmul.bf16.gmra.mxu0 %v315
  %v451 = vpop.f32.mrf.mxu0
  %v452 = vadd.f32 %v91, %v451
  %v453 = vpop.f32.mrf.mxu0
  %v454 = vadd.f32 %v91, %v453
  %455 = vmatmul.bf16.gmra.mxu0 %v318
  %v456 = vpop.f32.mrf.mxu0
  %v457 = vadd.f32 %v91, %v456
  %v458 = vpop.f32.mrf.mxu0
  %v459 = vadd.f32 %v91, %v458
  %460 = vmatmul.bf16.gmra.mxu0 %v321
  %v461 = vpop.f32.mrf.mxu0
  %v462 = vadd.f32 %v91, %v461
  %v463 = vpop.f32.mrf.mxu0
  %v464 = vadd.f32 %v91, %v463
  %465 = vmatmul.bf16.gmra.mxu0 %v324
  %v466 = vpop.f32.mrf.mxu0
  %v467 = vadd.f32 %v91, %v466
  %v468 = vpop.f32.mrf.mxu0
  %v469 = vadd.f32 %v91, %v468
  %470 = vmatmul.bf16.gmra.mxu0 %v327
  %v471 = vpop.f32.mrf.mxu0
  %v472 = vadd.f32 %v91, %v471
  %v473 = vpop.f32.mrf.mxu0
  %v474 = vadd.f32 %v91, %v473
  %475 = vmatmul.bf16.gmra.mxu0 %v330
  %v476 = vpop.f32.mrf.mxu0
  %v477 = vadd.f32 %v91, %v476
  %v478 = vpop.f32.mrf.mxu0
  %v479 = vadd.f32 %v91, %v478
  %480 = vmatmul.bf16.gmra.mxu0 %v333
  %v481 = vpop.f32.mrf.mxu0
  %v482 = vadd.f32 %v91, %v481
  %v483 = vpop.f32.mrf.mxu0
  %v484 = vadd.f32 %v91, %v483
  %485 = vmatmul.bf16.gmra.mxu0 %v336
  %v486 = vpop.f32.mrf.mxu0
  %v487 = vadd.f32 %v91, %v486
  %v488 = vpop.f32.mrf.mxu0
  %v489 = vadd.f32 %v91, %v488
  %490 = vmatmul.bf16.gmra.mxu0 %v339
  %v491 = vpop.f32.mrf.mxu0
  %v492 = vadd.f32 %v91, %v491
  %v493 = vpop.f32.mrf.mxu0
  %v494 = vadd.f32 %v91, %v493
  %495 = vmatmul.bf16.gmra.mxu0 %v342
  %v496 = vpop.f32.mrf.mxu0
  %v497 = vadd.f32 %v91, %v496
  %v498 = vpop.f32.mrf.mxu0
  %v499 = vadd.f32 %v91, %v498
  %500 = vmatmul.bf16.gmra.mxu0 %v345
  %v501 = vpop.f32.mrf.mxu0
  %v502 = vadd.f32 %v91, %v501
  %v503 = vpop.f32.mrf.mxu0
  %v504 = vadd.f32 %v91, %v503
  %505 = vmatmul.bf16.gmra.mxu0 %v348
  %v506 = vpop.f32.mrf.mxu0
  %v507 = vadd.f32 %v91, %v506
  %v508 = vpop.f32.mrf.mxu0
  %v509 = vadd.f32 %v91, %v508
  %510 = vmatmul.bf16.gmra.mxu0 %v351
  %v511 = vpop.f32.mrf.mxu0
  %v512 = vadd.f32 %v91, %v511
  %v513 = vpop.f32.mrf.mxu0
  %v514 = vadd.f32 %v91, %v513
  %515 = vmatmul.bf16.gmra.mxu0 %v354
  %v516 = vpop.f32.mrf.mxu0
  %v517 = vadd.f32 %v91, %v516
  %v518 = vpop.f32.mrf.mxu0
  %v519 = vadd.f32 %v91, %v518
  %520 = vmatmul.bf16.gmra.mxu0 %v357
  %v521 = vpop.f32.mrf.mxu0
  %v522 = vadd.f32 %v91, %v521
  %v523 = vpop.f32.mrf.mxu0
  %v524 = vadd.f32 %v91, %v523
  %525 = vmatmul.bf16.gmra.mxu0 %v360
  %v526 = vpop.f32.mrf.mxu0
  %v527 = vadd.f32 %v91, %v526
  %v528 = vpop.f32.mrf.mxu0
  %v529 = vadd.f32 %v91, %v528
  %530 = vdwg.mxu0
  %v531 = vmul.f32 %v372, 0.2
  %v532 = vmul.f32 %v374, 0.2
  %v533 = vmul.f32 %v377, 0.2
  %v534 = vmul.f32 %v379, 0.2
  %v535 = vmul.f32 %v382, 0.2
  %v536 = vmul.f32 %v384, 0.2
  %v537 = vmul.f32 %v387, 0.2
  %v538 = vmul.f32 %v389, 0.2
  %v539 = vmul.f32 %v392, 0.2
  %v540 = vmul.f32 %v394, 0.2
  %v541 = vmul.f32 %v397, 0.2
  %v542 = vmul.f32 %v399, 0.2
  %v543 = vmul.f32 %v402, 0.2
  %v544 = vmul.f32 %v404, 0.2
  %v545 = vmul.f32 %v407, 0.2
  %v546 = vmul.f32 %v409, 0.2
  %v547 = vmul.f32 %v412, 0.2
  %v548 = vmul.f32 %v414, 0.2
  %v549 = vmul.f32 %v417, 0.2
  %v550 = vmul.f32 %v419, 0.2
  %v551 = vmul.f32 %v422, 0.2
  %v552 = vmul.f32 %v424, 0.2
  %v553 = vmul.f32 %v427, 0.2
  %v554 = vmul.f32 %v429, 0.2
  %v555 = vmul.f32 %v432, 0.2
  %v556 = vmul.f32 %v434, 0.2
  %v557 = vmul.f32 %v437, 0.2
  %v558 = vmul.f32 %v439, 0.2
  %v559 = vmul.f32 %v442, 0.2
  %v560 = vmul.f32 %v444, 0.2
  %v561 = vmul.f32 %v447, 0.2
  %v562 = vmul.f32 %v449, 0.2
  %v563 = vmul.f32 %v452, 0.2
  %v564 = vmul.f32 %v454, 0.2
  %v565 = vmul.f32 %v457, 0.2
  %v566 = vmul.f32 %v459, 0.2
  %v567 = vmul.f32 %v462, 0.2
  %v568 = vmul.f32 %v464, 0.2
  %v569 = vmul.f32 %v467, 0.2
  %v570 = vmul.f32 %v469, 0.2
  %v571 = vmul.f32 %v472, 0.2
  %v572 = vmul.f32 %v474, 0.2
  %v573 = vmul.f32 %v477, 0.2
  %v574 = vmul.f32 %v479, 0.2
  %v575 = vmul.f32 %v482, 0.2
  %v576 = vmul.f32 %v484, 0.2
  %v577 = vmul.f32 %v487, 0.2
  %v578 = vmul.f32 %v489, 0.2
  %v579 = vmul.f32 %v492, 0.2
  %v580 = vmul.f32 %v494, 0.2
  %v581 = vmul.f32 %v497, 0.2
  %v582 = vmul.f32 %v499, 0.2
  %v583 = vmul.f32 %v502, 0.2
  %v584 = vmul.f32 %v504, 0.2
  %v585 = vmul.f32 %v507, 0.2
  %v586 = vmul.f32 %v509, 0.2
  %v587 = vmul.f32 %v512, 0.2
  %v588 = vmul.f32 %v514, 0.2
  %v589 = vmul.f32 %v517, 0.2
  %v590 = vmul.f32 %v519, 0.2
  %v591 = vmul.f32 %v522, 0.2
  %v592 = vmul.f32 %v524, 0.2
  %v593 = vmul.f32 %v527, 0.2
  %v594 = vmul.f32 %v529, 0.2
  %v595 = vmax.f32 %v372, %v531
  %v596 = vmax.f32 %v374, %v532
  %v597 = vmax.f32 %v377, %v533
  %v598 = vmax.f32 %v379, %v534
  %v599 = vmax.f32 %v382, %v535
  %v600 = vmax.f32 %v384, %v536
  %v601 = vmax.f32 %v387, %v537
  %v602 = vmax.f32 %v389, %v538
  %v603 = vmax.f32 %v392, %v539
  %v604 = vmax.f32 %v394, %v540
  %v605 = vmax.f32 %v397, %v541
  %v606 = vmax.f32 %v399, %v542
  %v607 = vmax.f32 %v402, %v543
  %v608 = vmax.f32 %v404, %v544
  %v609 = vmax.f32 %v407, %v545
  %v610 = vmax.f32 %v409, %v546
  %v611 = vmax.f32 %v412, %v547
  %v612 = vmax.f32 %v414, %v548
  %v613 = vmax.f32 %v417, %v549
  %v614 = vmax.f32 %v419, %v550
  %v615 = vmax.f32 %v422, %v551
  %v616 = vmax.f32 %v424, %v552
  %v617 = vmax.f32 %v427, %v553
  %v618 = vmax.f32 %v429, %v554
  %v619 = vmax.f32 %v432, %v555
  %v620 = vmax.f32 %v434, %v556
  %v621 = vmax.f32 %v437, %v557
  %v622 = vmax.f32 %v439, %v558
  %v623 = vmax.f32 %v442, %v559
  %v624 = vmax.f32 %v444, %v560
  %v625 = vmax.f32 %v447, %v561
  %v626 = vmax.f32 %v449, %v562
  %v627 = vmax.f32 %v452, %v563
  %v628 = vmax.f32 %v454, %v564
  %v629 = vmax.f32 %v457, %v565
  %v630 = vmax.f32 %v459, %v566
  %v631 = vmax.f32 %v462, %v567
  %v632 = vmax.f32 %v464, %v568
  %v633 = vmax.f32 %v467, %v569
  %v634 = vmax.f32 %v469, %v570
  %v635 = vmax.f32 %v472, %v571
  %v636 = vmax.f32 %v474, %v572
  %v637 = vmax.f32 %v477, %v573
  %v638 = vmax.f32 %v479, %v574
  %v639 = vmax.f32 %v482, %v575
  %v640 = vmax.f32 %v484, %v576
  %v641 = vmax.f32 %v487, %v577
  %v642 = vmax.f32 %v489, %v578
  %v643 = vmax.f32 %v492, %v579
  %v644 = vmax.f32 %v494, %v580
  %v645 = vmax.f32 %v497, %v581
  %v646 = vmax.f32 %v499, %v582
  %v647 = vmax.f32 %v502, %v583
  %v648 = vmax.f32 %v504, %v584
  %v649 = vmax.f32 %v507, %v585
  %v650 = vmax.f32 %v509, %v586
  %v651 = vmax.f32 %v512, %v587
  %v652 = vmax.f32 %v514, %v588
  %v653 = vmax.f32 %v517, %v589
  %v654 = vmax.f32 %v519, %v590
  %v655 = vmax.f32 %v522, %v591
  %v656 = vmax.f32 %v524, %v592
  %v657 = vmax.f32 %v527, %v593
  %v658 = vmax.f32 %v529, %v594
  %v659 = vpack.c.bf16 %v596, %v595
  %v660 = vpack.c.bf16 %v598, %v597
  %v661 = vpack.c.bf16 %v600, %v599
  %v662 = vpack.c.bf16 %v602, %v601
  %v663 = vpack.c.bf16 %v604, %v603
  %v664 = vpack.c.bf16 %v606, %v605
  %v665 = vpack.c.bf16 %v608, %v607
  %v666 = vpack.c.bf16 %v610, %v609
  %v667 = vpack.c.bf16 %v612, %v611
  %v668 = vpack.c.bf16 %v614, %v613
  %v669 = vpack.c.bf16 %v616, %v615
  %v670 = vpack.c.bf16 %v618, %v617
  %v671 = vpack.c.bf16 %v620, %v619
  %v672 = vpack.c.bf16 %v622, %v621
  %v673 = vpack.c.bf16 %v624, %v623
  %v674 = vpack.c.bf16 %v626, %v625
  %v675 = vpack.c.bf16 %v628, %v627
  %v676 = vpack.c.bf16 %v630, %v629
  %v677 = vpack.c.bf16 %v632, %v631
  %v678 = vpack.c.bf16 %v634, %v633
  %v679 = vpack.c.bf16 %v636, %v635
  %v680 = vpack.c.bf16 %v638, %v637
  %v681 = vpack.c.bf16 %v640, %v639
  %v682 = vpack.c.bf16 %v642, %v641
  %v683 = vpack.c.bf16 %v644, %v643
  %v684 = vpack.c.bf16 %v646, %v645
  %v685 = vpack.c.bf16 %v648, %v647
  %v686 = vpack.c.bf16 %v650, %v649
  %v687 = vpack.c.bf16 %v652, %v651
  %v688 = vpack.c.bf16 %v654, %v653
  %v689 = vpack.c.bf16 %v656, %v655
  %v690 = vpack.c.bf16 %v658, %v657
  %v691 = vld [vmem:[%s3] sm:$0xf]
  %v692 = vld [vmem:[%s3 + $0x4] sm:$0xf]
  %v693 = vld [vmem:[%s3 + $0x8] sm:$0xf]
  %v694 = vld [vmem:[%s3 + $0xc] sm:$0xf]
  %v695 = vld [vmem:[%s3 + $0x10] sm:$0xf]
  %v696 = vld [vmem:[%s3 + $0x14] sm:$0xf]
  %v697 = vld [vmem:[%s3 + $0x18] sm:$0xf]
  %v698 = vld [vmem:[%s3 + $0x1c] sm:$0xf]
  %v699 = vld [vmem:[%s3 + $0x20] sm:$0xf]
  %v700 = vld [vmem:[%s3 + $0x24] sm:$0xf]
  %v701 = vld [vmem:[%s3 + $0x28] sm:$0xf]
  %v702 = vld [vmem:[%s3 + $0x2c] sm:$0xf]
  %v703 = vld [vmem:[%s3 + $0x30] sm:$0xf]
  %v704 = vld [vmem:[%s3 + $0x34] sm:$0xf]
  %v705 = vld [vmem:[%s3 + $0x38] sm:$0xf]
  %v706 = vld [vmem:[%s3 + $0x3c] sm:$0xf]
  %v707 = vld [vmem:[%s4] sm:$0x1]
  %v709 = vperm.slane %v707, 0
  %v727 = vunpack.c.l.b16 %v691
  %v728 = vunpack.c.l.b16 %v692
  %v729 = vunpack.c.l.b16 %v693
  %v730 = vunpack.c.l.b16 %v694
  %v731 = vunpack.c.l.b16 %v695
  %v732 = vunpack.c.l.b16 %v696
  %v733 = vunpack.c.l.b16 %v697
  %v734 = vunpack.c.l.b16 %v698
  %v735 = vunpack.c.l.b16 %v699
  %v736 = vunpack.c.l.b16 %v700
  %v737 = vunpack.c.l.b16 %v701
  %v738 = vunpack.c.l.b16 %v702
  %v739 = vunpack.c.l.b16 %v703
  %v740 = vunpack.c.l.b16 %v704
  %v741 = vunpack.c.l.b16 %v705
  %v742 = vunpack.c.l.b16 %v706
  %v743 = vpack.c.b16 %v728, %v727
  %v744 = vpack.c.b16 %v730, %v729
  %v745 = vpack.c.b16 %v732, %v731
  %v746 = vpack.c.b16 %v734, %v733
  %v747 = vpack.c.b16 %v736, %v735
  %v748 = vpack.c.b16 %v738, %v737
  %v749 = vpack.c.b16 %v740, %v739
  %v750 = vpack.c.b16 %v742, %v741
  %759 = vmatpush.bf16.msra.mxu0 %v750
  %760 = vmatpush.bf16.msra.mxu0 %v749
  %761 = vmatpush.bf16.msra.mxu0 %v748
  %762 = vmatpush.bf16.msra.mxu0 %v747
  %763 = vmatpush.bf16.msra.mxu0 %v746
  %764 = vmatpush.bf16.msra.mxu0 %v745
  %765 = vmatpush.bf16.msra.mxu0 %v744
  %766 = vmatpush.bf16.msra.mxu0 %v743
  %767 = vmatmul.bf16.gmra.mxu0 %v659
  %v768 = vpop.f32.mrf.mxu0
  %v769 = vadd.f32 %v709, %v768
  %v770 = vpop.f32.mrf.mxu0
  %v771 = vadd.f32 %v709, %v770
  %772 = vmatmul.bf16.gmra.mxu0 %v660
  %v773 = vpop.f32.mrf.mxu0
  %v774 = vadd.f32 %v709, %v773
  %v775 = vpop.f32.mrf.mxu0
  %v776 = vadd.f32 %v709, %v775
  %777 = vmatmul.bf16.gmra.mxu0 %v661
  %v778 = vpop.f32.mrf.mxu0
  %v779 = vadd.f32 %v709, %v778
  %v780 = vpop.f32.mrf.mxu0
  %v781 = vadd.f32 %v709, %v780
  %782 = vmatmul.bf16.gmra.mxu0 %v662
  %v783 = vpop.f32.mrf.mxu0
  %v784 = vadd.f32 %v709, %v783
  %v785 = vpop.f32.mrf.mxu0
  %v786 = vadd.f32 %v709, %v785
  %787 = vmatmul.bf16.gmra.mxu0 %v663
  %v788 = vpop.f32.mrf.mxu0
  %v789 = vadd.f32 %v709, %v788
  %v790 = vpop.f32.mrf.mxu0
  %v791 = vadd.f32 %v709, %v790
  %792 = vmatmul.bf16.gmra.mxu0 %v664
  %v793 = vpop.f32.mrf.mxu0
  %v794 = vadd.f32 %v709, %v793
  %v795 = vpop.f32.mrf.mxu0
  %v796 = vadd.f32 %v709, %v795
  %797 = vmatmul.bf16.gmra.mxu0 %v665
  %v798 = vpop.f32.mrf.mxu0
  %v799 = vadd.f32 %v709, %v798
  %v800 = vpop.f32.mrf.mxu0
  %v801 = vadd.f32 %v709, %v800
  %802 = vmatmul.bf16.gmra.mxu0 %v666
  %v803 = vpop.f32.mrf.mxu0
  %v804 = vadd.f32 %v709, %v803
  %v805 = vpop.f32.mrf.mxu0
  %v806 = vadd.f32 %v709, %v805
  %807 = vmatmul.bf16.gmra.mxu0 %v667
  %v808 = vpop.f32.mrf.mxu0
  %v809 = vadd.f32 %v709, %v808
  %v810 = vpop.f32.mrf.mxu0
  %v811 = vadd.f32 %v709, %v810
  %812 = vmatmul.bf16.gmra.mxu0 %v668
  %v813 = vpop.f32.mrf.mxu0
  %v814 = vadd.f32 %v709, %v813
  %v815 = vpop.f32.mrf.mxu0
  %v816 = vadd.f32 %v709, %v815
  %817 = vmatmul.bf16.gmra.mxu0 %v669
  %v818 = vpop.f32.mrf.mxu0
  %v819 = vadd.f32 %v709, %v818
  %v820 = vpop.f32.mrf.mxu0
  %v821 = vadd.f32 %v709, %v820
  %822 = vmatmul.bf16.gmra.mxu0 %v670
  %v823 = vpop.f32.mrf.mxu0
  %v824 = vadd.f32 %v709, %v823
  %v825 = vpop.f32.mrf.mxu0
  %v826 = vadd.f32 %v709, %v825
  %827 = vmatmul.bf16.gmra.mxu0 %v671
  %v828 = vpop.f32.mrf.mxu0
  %v829 = vadd.f32 %v709, %v828
  %v830 = vpop.f32.mrf.mxu0
  %v831 = vadd.f32 %v709, %v830
  %832 = vmatmul.bf16.gmra.mxu0 %v672
  %v833 = vpop.f32.mrf.mxu0
  %v834 = vadd.f32 %v709, %v833
  %v835 = vpop.f32.mrf.mxu0
  %v836 = vadd.f32 %v709, %v835
  %837 = vmatmul.bf16.gmra.mxu0 %v673
  %v838 = vpop.f32.mrf.mxu0
  %v839 = vadd.f32 %v709, %v838
  %v840 = vpop.f32.mrf.mxu0
  %v841 = vadd.f32 %v709, %v840
  %842 = vmatmul.bf16.gmra.mxu0 %v674
  %v843 = vpop.f32.mrf.mxu0
  %v844 = vadd.f32 %v709, %v843
  %v845 = vpop.f32.mrf.mxu0
  %v846 = vadd.f32 %v709, %v845
  %847 = vmatmul.bf16.gmra.mxu0 %v675
  %v848 = vpop.f32.mrf.mxu0
  %v849 = vadd.f32 %v709, %v848
  %v850 = vpop.f32.mrf.mxu0
  %v851 = vadd.f32 %v709, %v850
  %852 = vmatmul.bf16.gmra.mxu0 %v676
  %v853 = vpop.f32.mrf.mxu0
  %v854 = vadd.f32 %v709, %v853
  %v855 = vpop.f32.mrf.mxu0
  %v856 = vadd.f32 %v709, %v855
  %857 = vmatmul.bf16.gmra.mxu0 %v677
  %v858 = vpop.f32.mrf.mxu0
  %v859 = vadd.f32 %v709, %v858
  %v860 = vpop.f32.mrf.mxu0
  %v861 = vadd.f32 %v709, %v860
  %862 = vmatmul.bf16.gmra.mxu0 %v678
  %v863 = vpop.f32.mrf.mxu0
  %v864 = vadd.f32 %v709, %v863
  %v865 = vpop.f32.mrf.mxu0
  %v866 = vadd.f32 %v709, %v865
  %867 = vmatmul.bf16.gmra.mxu0 %v679
  %v868 = vpop.f32.mrf.mxu0
  %v869 = vadd.f32 %v709, %v868
  %v870 = vpop.f32.mrf.mxu0
  %v871 = vadd.f32 %v709, %v870
  %872 = vmatmul.bf16.gmra.mxu0 %v680
  %v873 = vpop.f32.mrf.mxu0
  %v874 = vadd.f32 %v709, %v873
  %v875 = vpop.f32.mrf.mxu0
  %v876 = vadd.f32 %v709, %v875
  %877 = vmatmul.bf16.gmra.mxu0 %v681
  %v878 = vpop.f32.mrf.mxu0
  %v879 = vadd.f32 %v709, %v878
  %v880 = vpop.f32.mrf.mxu0
  %v881 = vadd.f32 %v709, %v880
  %882 = vmatmul.bf16.gmra.mxu0 %v682
  %v883 = vpop.f32.mrf.mxu0
  %v884 = vadd.f32 %v709, %v883
  %v885 = vpop.f32.mrf.mxu0
  %v886 = vadd.f32 %v709, %v885
  %887 = vmatmul.bf16.gmra.mxu0 %v683
  %v888 = vpop.f32.mrf.mxu0
  %v889 = vadd.f32 %v709, %v888
  %v890 = vpop.f32.mrf.mxu0
  %v891 = vadd.f32 %v709, %v890
  %892 = vmatmul.bf16.gmra.mxu0 %v684
  %v893 = vpop.f32.mrf.mxu0
  %v894 = vadd.f32 %v709, %v893
  %v895 = vpop.f32.mrf.mxu0
  %v896 = vadd.f32 %v709, %v895
  %897 = vmatmul.bf16.gmra.mxu0 %v685
  %v898 = vpop.f32.mrf.mxu0
  %v899 = vadd.f32 %v709, %v898
  %v900 = vpop.f32.mrf.mxu0
  %v901 = vadd.f32 %v709, %v900
  %902 = vmatmul.bf16.gmra.mxu0 %v686
  %v903 = vpop.f32.mrf.mxu0
  %v904 = vadd.f32 %v709, %v903
  %v905 = vpop.f32.mrf.mxu0
  %v906 = vadd.f32 %v709, %v905
  %907 = vmatmul.bf16.gmra.mxu0 %v687
  %v908 = vpop.f32.mrf.mxu0
  %v909 = vadd.f32 %v709, %v908
  %v910 = vpop.f32.mrf.mxu0
  %v911 = vadd.f32 %v709, %v910
  %912 = vmatmul.bf16.gmra.mxu0 %v688
  %v913 = vpop.f32.mrf.mxu0
  %v914 = vadd.f32 %v709, %v913
  %v915 = vpop.f32.mrf.mxu0
  %v916 = vadd.f32 %v709, %v915
  %917 = vmatmul.bf16.gmra.mxu0 %v689
  %v918 = vpop.f32.mrf.mxu0
  %v919 = vadd.f32 %v709, %v918
  %v920 = vpop.f32.mrf.mxu0
  %v921 = vadd.f32 %v709, %v920
  %922 = vmatmul.bf16.gmra.mxu0 %v690
  %v923 = vpop.f32.mrf.mxu0
  %v924 = vadd.f32 %v709, %v923
  %v925 = vpop.f32.mrf.mxu0
  %v926 = vadd.f32 %v709, %v925
  %927 = vdwg.mxu0
  %vm928 = vcmask 31744
  %929 = vst.msk [vmem:[%s5] sm:$0xff] %vm928, %v769
  %930 = vst.msk [vmem:[%s5 + $0x8] sm:$0xff] %vm928, %v771
  %931 = vst.msk [vmem:[%s5 + $0x10] sm:$0xff] %vm928, %v774
  %932 = vst.msk [vmem:[%s5 + $0x18] sm:$0xff] %vm928, %v776
  %933 = vst.msk [vmem:[%s5 + $0x20] sm:$0xff] %vm928, %v779
  %934 = vst.msk [vmem:[%s5 + $0x28] sm:$0xff] %vm928, %v781
  %935 = vst.msk [vmem:[%s5 + $0x30] sm:$0xff] %vm928, %v784
  %936 = vst.msk [vmem:[%s5 + $0x38] sm:$0xff] %vm928, %v786
  %937 = vst.msk [vmem:[%s5 + $0x40] sm:$0xff] %vm928, %v789
  %938 = vst.msk [vmem:[%s5 + $0x48] sm:$0xff] %vm928, %v791
  %939 = vst.msk [vmem:[%s5 + $0x50] sm:$0xff] %vm928, %v794
  %940 = vst.msk [vmem:[%s5 + $0x58] sm:$0xff] %vm928, %v796
  %941 = vst.msk [vmem:[%s5 + $0x60] sm:$0xff] %vm928, %v799
  %942 = vst.msk [vmem:[%s5 + $0x68] sm:$0xff] %vm928, %v801
  %943 = vst.msk [vmem:[%s5 + $0x70] sm:$0xff] %vm928, %v804
  %944 = vst.msk [vmem:[%s5 + $0x78] sm:$0xff] %vm928, %v806
  %945 = vst.msk [vmem:[%s5 + $0x80] sm:$0xff] %vm928, %v809
  %946 = vst.msk [vmem:[%s5 + $0x88] sm:$0xff] %vm928, %v811
  %947 = vst.msk [vmem:[%s5 + $0x90] sm:$0xff] %vm928, %v814
  %948 = vst.msk [vmem:[%s5 + $0x98] sm:$0xff] %vm928, %v816
  %949 = vst.msk [vmem:[%s5 + $0xa0] sm:$0xff] %vm928, %v819
  %950 = vst.msk [vmem:[%s5 + $0xa8] sm:$0xff] %vm928, %v821
  %951 = vst.msk [vmem:[%s5 + $0xb0] sm:$0xff] %vm928, %v824
  %952 = vst.msk [vmem:[%s5 + $0xb8] sm:$0xff] %vm928, %v826
  %953 = vst.msk [vmem:[%s5 + $0xc0] sm:$0xff] %vm928, %v829
  %954 = vst.msk [vmem:[%s5 + $0xc8] sm:$0xff] %vm928, %v831
  %955 = vst.msk [vmem:[%s5 + $0xd0] sm:$0xff] %vm928, %v834
  %956 = vst.msk [vmem:[%s5 + $0xd8] sm:$0xff] %vm928, %v836
  %957 = vst.msk [vmem:[%s5 + $0xe0] sm:$0xff] %vm928, %v839
  %958 = vst.msk [vmem:[%s5 + $0xe8] sm:$0xff] %vm928, %v841
  %959 = vst.msk [vmem:[%s5 + $0xf0] sm:$0xff] %vm928, %v844
  %960 = vst.msk [vmem:[%s5 + $0xf8] sm:$0xff] %vm928, %v846
  %961 = vst.msk [vmem:[%s5 + $0x100] sm:$0xff] %vm928, %v849
  %962 = vst.msk [vmem:[%s5 + $0x108] sm:$0xff] %vm928, %v851
  %963 = vst.msk [vmem:[%s5 + $0x110] sm:$0xff] %vm928, %v854
  %964 = vst.msk [vmem:[%s5 + $0x118] sm:$0xff] %vm928, %v856
  %965 = vst.msk [vmem:[%s5 + $0x120] sm:$0xff] %vm928, %v859
  %966 = vst.msk [vmem:[%s5 + $0x128] sm:$0xff] %vm928, %v861
  %967 = vst.msk [vmem:[%s5 + $0x130] sm:$0xff] %vm928, %v864
  %968 = vst.msk [vmem:[%s5 + $0x138] sm:$0xff] %vm928, %v866
  %969 = vst.msk [vmem:[%s5 + $0x140] sm:$0xff] %vm928, %v869
  %970 = vst.msk [vmem:[%s5 + $0x148] sm:$0xff] %vm928, %v871
  %971 = vst.msk [vmem:[%s5 + $0x150] sm:$0xff] %vm928, %v874
  %972 = vst.msk [vmem:[%s5 + $0x158] sm:$0xff] %vm928, %v876
  %973 = vst.msk [vmem:[%s5 + $0x160] sm:$0xff] %vm928, %v879
  %974 = vst.msk [vmem:[%s5 + $0x168] sm:$0xff] %vm928, %v881
  %975 = vst.msk [vmem:[%s5 + $0x170] sm:$0xff] %vm928, %v884
  %976 = vst.msk [vmem:[%s5 + $0x178] sm:$0xff] %vm928, %v886
  %977 = vst.msk [vmem:[%s5 + $0x180] sm:$0xff] %vm928, %v889
  %978 = vst.msk [vmem:[%s5 + $0x188] sm:$0xff] %vm928, %v891
  %979 = vst.msk [vmem:[%s5 + $0x190] sm:$0xff] %vm928, %v894
  %980 = vst.msk [vmem:[%s5 + $0x198] sm:$0xff] %vm928, %v896
  %981 = vst.msk [vmem:[%s5 + $0x1a0] sm:$0xff] %vm928, %v899
  %982 = vst.msk [vmem:[%s5 + $0x1a8] sm:$0xff] %vm928, %v901
  %983 = vst.msk [vmem:[%s5 + $0x1b0] sm:$0xff] %vm928, %v904
  %984 = vst.msk [vmem:[%s5 + $0x1b8] sm:$0xff] %vm928, %v906
  %985 = vst.msk [vmem:[%s5 + $0x1c0] sm:$0xff] %vm928, %v909
  %986 = vst.msk [vmem:[%s5 + $0x1c8] sm:$0xff] %vm928, %v911
  %987 = vst.msk [vmem:[%s5 + $0x1d0] sm:$0xff] %vm928, %v914
  %988 = vst.msk [vmem:[%s5 + $0x1d8] sm:$0xff] %vm928, %v916
  %989 = vst.msk [vmem:[%s5 + $0x1e0] sm:$0xff] %vm928, %v919
  %990 = vst.msk [vmem:[%s5 + $0x1e8] sm:$0xff] %vm928, %v921
  %991 = vst.msk [vmem:[%s5 + $0x1f0] sm:$0xff] %vm928, %v924
  %992 = vst.msk [vmem:[%s5 + $0x1f8] sm:$0xff] %vm928, %v926
  // Predicated region
  $region22: #{tpu_custom_call.1} parent=0 // pred_check
    _
  $region23: #{tpu_custom_call.1} parent=0 // pred_check_branch
    %994 = sbr.rel (0) target = $region25
  $region24: #{tpu_custom_call.1} parent=0 // pred_region
    _
  $region25: #{tpu_custom_call.1} parent=0 // pred_fallthru
    _
  // Predicated region
  $region26: #{tpu_custom_call.1} parent=0 // pred_check
    _
  $region27: #{tpu_custom_call.1} parent=0 // pred_check_branch
    %996 = sbr.rel (0) target = $region29
  $region28: #{tpu_custom_call.1} parent=0 // pred_region
    _
  $region29: #{tpu_custom_call.1} parent=0 // pred_fallthru
    _

</llo_original>
